<compile_context>
chip_gen: v7x
topology: tpu7x:2x2x1
jax: 0.10.0
libtpu: 0.0.40
codegen_flags: <defaults>
</compile_context>

<pallas_src>
import jax
import jax.numpy as jnp
from jax.experimental import pallas as pl
from jax.experimental.pallas import tpu as pltpu


def _round_up(x, m):
    return ((x + m - 1) // m) * m


def _cdiv(a, b):
    return (a + b - 1) // b


def _vmem_budget_bytes():
    """85% of the per-core VMEM capacity (leave headroom for compiler scratch)."""
    try:
        cap = int(pltpu.get_tpu_info().vmem_capacity_bytes)
    except Exception:
        cap = 64 << 20  # conservative fallback (v7x per-TensorCore VMEM)
    return int(cap * 0.85)


def _make_root_kernel(child_channels, residual, fused, n_co, t_cout):
    """Kernel refs:
       fused:     x_0..x_{n-1}, w_full, shift, out, xcat_scratch
       per-child: x_0..x_{n-1}, w_0..w_{n-1}, shift, out
    """
    n = len(child_channels)
    offs = [0]
    for ci in child_channels:
        offs.append(offs[-1] + ci)

    def kernel(*refs):
        xs = refs[:n]
        if fused:
            w_ref = refs[n]
            shift_ref = refs[n + 1]
            o_ref = refs[n + 2]
            xcat_ref = refs[n + 3]
            # Stage all children into one (C_in_total, t_hw) VMEM tile so the
            # contraction is a single MXU pass instead of n small-K passes.
            for i in range(n):
                xcat_ref[offs[i]:offs[i + 1], :] = xs[i][...]
            acc = jnp.dot(w_ref[...], xcat_ref[...],
                          preferred_element_type=jnp.float32)
        else:
            ws = refs[n:2 * n]
            shift_ref = refs[2 * n]
            o_ref = refs[2 * n + 1]
            acc = jnp.dot(ws[0][...], xs[0][...],
                          preferred_element_type=jnp.float32)
            for i in range(1, n):
                acc = acc + jnp.dot(ws[i][...], xs[i][...],
                                    preferred_element_type=jnp.float32)

        # Folded BN: scale already baked into the weights, only the f32 shift remains.
        acc = acc + shift_ref[...]                      # (t_cout, 1) broadcast

        if residual:
            # children[0] tile is already resident in VMEM for the matmul.
            if n_co == 1:
                res = xs[0][...]
            else:
                co = pl.program_id(2)
                start = pl.multiple_of(co * t_cout, t_cout)
                res = xs[0][pl.ds(start, t_cout), :]
            acc = acc + res.astype(jnp.float32)

        o_ref[...] = jnp.maximum(acc, 0.0).astype(o_ref.dtype)

    return kernel


def root_forward(children, conv_w, bn_gamma, bn_beta, bn_mean, bn_var, *,
                 residual=True, eps=1e-5, t_hw=2048, input_buffers=2):
    """children: list of NCHW arrays (same dtype; bf16 recommended upstream).
    conv_w: (C_out, C_in_total) or (C_out, C_in_total, 1, 1) 1x1 conv weight."""
    n_children = len(children)
    N, _, H, W = children[0].shape
    child_channels = [int(c.shape[1]) for c in children]
    C_in = sum(child_channels)
    if conv_w.ndim == 4:
        conv_w = conv_w.reshape(conv_w.shape[0], conv_w.shape[1])
    C_out = int(conv_w.shape[0])
    assert conv_w.shape[1] == C_in, "conv weight in_channels must match concat"
    if residual:
        assert child_channels[0] == C_out, "residual requires C(child0) == C_out"

    x_dtype = children[0].dtype          # HBM / matmul dtype (use bf16 upstream)
    out_dtype = x_dtype
    HW = H * W

    # ---- host-side BN fold: scale into W (f32), shift kept as an f32 bias ----
    inv_std = 1.0 / jnp.sqrt(bn_var.astype(jnp.float32) + eps)
    scale = bn_gamma.astype(jnp.float32) * inv_std                       # (C_out,)
    shift = (bn_beta.astype(jnp.float32)
             - bn_mean.astype(jnp.float32) * scale).reshape(C_out, 1)    # (C_out, 1) f32
    w_scaled = (conv_w.astype(jnp.float32) * scale[:, None]).astype(x_dtype)

    # children as (N, C_i, HW) — a free reshape of contiguous NCHW; no pad, no cast
    xs = [c.reshape(N, c.shape[1], HW) for c in children]

    # ---- tiling selection ----
    fused = min(child_channels) < 128      # small-K children → one fused MXU pass
    comp_isz = jnp.dtype(x_dtype).itemsize
    out_isz = jnp.dtype(out_dtype).itemsize

    t_hw = _round_up(min(int(t_hw), _round_up(HW, 128)), 128)
    if N == 1:
        # Megacore balance: make sure both TensorCores get spatial tiles.
        t_hw = min(t_hw, max(128, _round_up(_cdiv(HW, 2), 128)))

    vmem_budget = _vmem_budget_bytes()

    def footprint(thw, tco):
        b = C_in * thw * comp_isz * int(input_buffers)   # child tiles (pipelined)
        b += tco * thw * out_isz * 2                      # output tiles (double-buffered)
        b += tco * C_in * comp_isz * 2                    # weight tile(s)
        b += tco * 4 * 2                                  # shift
        if fused:
            b += C_in * thw * comp_isz                    # staging scratch (single)
        return b + (2 << 20)                              # slack

    n_co, t_cout = 1, C_out
    while footprint(t_hw, t_cout) > vmem_budget:
        can_split = (C_out % (2 * n_co) == 0) and ((C_out // (2 * n_co)) % 8 == 0)
        if can_split and t_cout > 128:            # keep the lane-dense spatial tile
            n_co *= 2
            t_cout = C_out // n_co
        elif t_hw > 512:
            t_hw = max(512, _round_up(t_hw // 2, 128))
        elif can_split and t_cout > 8:
            n_co *= 2
            t_cout = C_out // n_co
        elif t_hw > 128:
            t_hw = max(128, _round_up(t_hw // 2, 128))
        else:
            break

    n_hw = _cdiv(HW, t_hw)                 # ragged last tile handled by Pallas masking
    grid = (N, n_hw, n_co)                 # co innermost → child tiles reused across co

    # ---- BlockSpecs ----
    x_kwargs = {}
    if int(input_buffers) != 2:
        x_kwargs["pipeline_mode"] = pl.Buffered(int(input_buffers))
    in_specs = [pl.BlockSpec((None, ci, t_hw), lambda b, j, co: (b, 0, j), **x_kwargs)
                for ci in child_channels]
    if fused:
        in_specs.append(pl.BlockSpec((t_cout, C_in), lambda b, j, co: (co, 0)))
        operands = (*xs, w_scaled, shift)
        scratch_shapes = [pltpu.VMEM((C_in, t_hw), x_dtype)]
    else:
        offs = [0]
        for ci in child_channels:
            offs.append(offs[-1] + ci)
        ws = [w_scaled[:, offs[i]:offs[i + 1]] for i in range(n_children)]
        in_specs += [pl.BlockSpec((t_cout, ci), lambda b, j, co: (co, 0))
                     for ci in child_channels]
        operands = (*xs, *ws, shift)
        scratch_shapes = []
    in_specs.append(pl.BlockSpec((t_cout, 1), lambda b, j, co: (co, 0)))
    out_spec = pl.BlockSpec((None, t_cout, t_hw), lambda b, j, co: (b, co, j))

    kernel = _make_root_kernel(child_channels, residual, fused, n_co, t_cout)

    out = pl.pallas_call(
        kernel,
        out_shape=jax.ShapeDtypeStruct((N, C_out, HW), out_dtype),
        grid_spec=pltpu.PrefetchScalarGridSpec(
            num_scalar_prefetch=0,
            grid=grid,
            in_specs=in_specs,
            out_specs=out_spec,
            scratch_shapes=scratch_shapes,
        ),
        compiler_params=pltpu.CompilerParams(
            dimension_semantics=("parallel", "parallel", "parallel"),
            vmem_limit_bytes=int(vmem_budget)),
    )(*operands)

    return out.reshape(N, C_out, H, W)


def root_reference(children, conv_w, bn_gamma, bn_beta, bn_mean, bn_var, *,
                   residual=True, eps=1e-5):
    """Pure-JAX f32 reference mirroring the PyTorch forward (inference BN)."""
    if conv_w.ndim == 4:
        conv_w = conv_w.reshape(conv_w.shape[0], conv_w.shape[1])
    children = [c.astype(jnp.float32) for c in children]
    x = jnp.concatenate(children, axis=1)                       # NCHW
    y = jnp.einsum('nchw,oc->nohw', x, conv_w.astype(jnp.float32))
    inv = 1.0 / jnp.sqrt(bn_var.astype(jnp.float32) + eps)
    y = (y - bn_mean[None, :, None, None]) * (bn_gamma * inv)[None, :, None, None] \
        + bn_beta[None, :, None, None]
    if residual:
        y = y + children[0]
    return jnp.maximum(y, 0.0)


if __name__ == "__main__":
    key = jax.random.PRNGKey(0)
    ks = jax.random.split(key, 14)

    # --- Test 1: module-implied small shapes, bf16 activations (recommended),
    #     fused small-channel path, residual. ---
    N, Cc, H, W = 2, 4, 16, 16
    C_out, C_in = 4, 8
    child0 = jax.random.normal(ks[0], (N, Cc, H, W), dtype=jnp.float32)
    child1 = jax.random.normal(ks[1], (N, Cc, H, W), dtype=jnp.float32)
    conv_w = 0.1 * jax.random.normal(ks[2], (C_out, C_in, 1, 1), dtype=jnp.float32)
    gamma = 1.0 + 0.1 * jax.random.normal(ks[3], (C_out,), dtype=jnp.float32)
    beta = 0.05 * jax.random.normal(ks[4], (C_out,), dtype=jnp.float32)
    mean = 0.1 * jax.random.normal(ks[5], (C_out,), dtype=jnp.float32)
    var = jnp.abs(jax.random.normal(ks[6], (C_out,), dtype=jnp.float32)) + 0.5

    ch_bf = [child0.astype(jnp.bfloat16), child1.astype(jnp.bfloat16)]
    out = jax.block_until_ready(
        root_forward(ch_bf, conv_w, gamma, beta, mean, var, residual=True))
    ref = root_reference(ch_bf, conv_w, gamma, beta, mean, var, residual=True)
    assert out.shape == (N, C_out, H, W)
    assert jnp.allclose(out.astype(jnp.float32), ref, atol=5e-2, rtol=5e-2), \
        "mismatch vs reference (bf16, residual)"

    # --- Test 2: f32 path (tight tolerance), residual and plain. ---
    ch32 = [child0, child1]
    out32 = jax.block_until_ready(
        root_forward(ch32, conv_w, gamma, beta, mean, var, residual=True))
    ref32 = root_reference(ch32, conv_w, gamma, beta, mean, var, residual=True)
    assert jnp.allclose(out32, ref32, atol=5e-4, rtol=5e-4), \
        "mismatch vs reference (f32, residual)"

    out32n = jax.block_until_ready(
        root_forward(ch32, conv_w, gamma, beta, mean, var, residual=False))
    ref32n = root_reference(ch32, conv_w, gamma, beta, mean, var, residual=False)
    assert jnp.allclose(out32n, ref32n, atol=5e-4, rtol=5e-4), \
        "mismatch vs reference (f32, plain)"

    # --- Test 3: wide channels -> per-child MXU path, ragged spatial tile
    #     (H*W not a multiple of 128), N == 1 megacore split, bf16. ---
    N3, Cc3, H3, W3 = 1, 128, 20, 20
    C_out3, C_in3 = 128, 256
    c30 = jax.random.normal(ks[7], (N3, Cc3, H3, W3), dtype=jnp.float32).astype(jnp.bfloat16)
    c31 = jax.random.normal(ks[8], (N3, Cc3, H3, W3), dtype=jnp.float32).astype(jnp.bfloat16)
    w3 = 0.05 * jax.random.normal(ks[9], (C_out3, C_in3, 1, 1), dtype=jnp.float32)
    g3 = 1.0 + 0.1 * jax.random.normal(ks[10], (C_out3,), dtype=jnp.float32)
    b3 = 0.05 * jax.random.normal(ks[11], (C_out3,), dtype=jnp.float32)
    m3 = 0.1 * jax.random.normal(ks[12], (C_out3,), dtype=jnp.float32)
    v3 = jnp.abs(jax.random.normal(ks[13], (C_out3,), dtype=jnp.float32)) + 0.5

    out3 = jax.block_until_ready(
        root_forward([c30, c31], w3, g3, b3, m3, v3, residual=True))
    ref3 = root_reference([c30, c31], w3, g3, b3, m3, v3, residual=True)
    assert out3.shape == (N3, C_out3, H3, W3)
    assert jnp.allclose(out3.astype(jnp.float32), ref3, atol=6e-2, rtol=6e-2), \
        "mismatch vs reference (bf16, wide channels, ragged HW)"

    print("KERNEL_OK")
</pallas_src>

<mosaic_0001>
module attributes {stable_mosaic.version = 11 : i64} {
  func.func @kernel(%arg0: i32, %arg1: i32, %arg2: i32, %arg3: memref<1x4x256xbf16, #tpu.memory_space<vmem>>, %arg4: memref<1x4x256xbf16, #tpu.memory_space<vmem>>, %arg5: memref<4x8xbf16, #tpu.memory_space<vmem>>, %arg6: memref<4x1xf32, #tpu.memory_space<vmem>>, %arg7: memref<1x4x256xbf16, #tpu.memory_space<vmem>>, %arg8: memref<8x256xbf16, #tpu.memory_space<vmem>>) attributes {dimension_semantics = [#tpu.dimension_semantics<parallel>, #tpu.dimension_semantics<parallel>, #tpu.dimension_semantics<parallel>], iteration_bounds = array<i64: 2, 1, 1>, scalar_prefetch = 0 : i64, scratch_operands = 1 : i64, tpu.core_type = #tpu.core_type<tc>, window_params = [{transform_indices = @transform_0, window_bounds = array<i64: 1, 4, 256>}, {transform_indices = @transform_1, window_bounds = array<i64: 1, 4, 256>}, {transform_indices = @transform_2, window_bounds = array<i64: 4, 8>}, {transform_indices = @transform_3, window_bounds = array<i64: 4, 1>}, {transform_indices = @transform_4, window_bounds = array<i64: 1, 4, 256>}]} {
    %c0 = arith.constant 0 : index
    %c0_0 = arith.constant 0 : index
    %c0_1 = arith.constant 0 : index
    %0 = vector.load %arg3[%c0, %c0_0, %c0_1] : memref<1x4x256xbf16, #tpu.memory_space<vmem>>, vector<1x4x256xbf16>
    %1 = vector.shape_cast %0 : vector<1x4x256xbf16> to vector<4x256xbf16>
    %c0_2 = arith.constant 0 : index
    %c0_3 = arith.constant 0 : index
    %2 = vector.load %arg8[%c0_2, %c0_3] : memref<8x256xbf16, #tpu.memory_space<vmem>>, vector<4x256xbf16>
    tpu.vector_store %arg8[%c0_2, %c0_3], %1 {strides = array<i32>} : memref<8x256xbf16, #tpu.memory_space<vmem>>, vector<4x256xbf16>,
    %c0_4 = arith.constant 0 : index
    %c0_5 = arith.constant 0 : index
    %c0_6 = arith.constant 0 : index
    %3 = vector.load %arg4[%c0_4, %c0_5, %c0_6] : memref<1x4x256xbf16, #tpu.memory_space<vmem>>, vector<1x4x256xbf16>
    %4 = vector.shape_cast %3 : vector<1x4x256xbf16> to vector<4x256xbf16>
    %c4 = arith.constant 4 : index
    %c0_7 = arith.constant 0 : index
    %5 = vector.load %arg8[%c4, %c0_7] : memref<8x256xbf16, #tpu.memory_space<vmem>>, vector<4x256xbf16>
    tpu.vector_store %arg8[%c4, %c0_7], %4 {strides = array<i32>} : memref<8x256xbf16, #tpu.memory_space<vmem>>, vector<4x256xbf16>,
    %c0_8 = arith.constant 0 : index
    %c0_9 = arith.constant 0 : index
    %6 = vector.load %arg5[%c0_8, %c0_9] : memref<4x8xbf16, #tpu.memory_space<vmem>>, vector<4x8xbf16>
    %c0_10 = arith.constant 0 : index
    %c0_11 = arith.constant 0 : index
    %7 = vector.load %arg8[%c0_10, %c0_11] : memref<8x256xbf16, #tpu.memory_space<vmem>>, vector<8x256xbf16>
    %cst = arith.constant dense<0.000000e+00> : vector<4x256xf32>
    %8 = tpu.matmul %6, %7, %cst {dimension_numbers = #tpu.dot_dimension_numbers<[1], [0], [0], [1], [0, 0, 1, 1], [], []>} : vector<4x8xbf16>, vector<8x256xbf16>, vector<4x256xf32> -> vector<4x256xf32>
    %c0_12 = arith.constant 0 : index
    %c0_13 = arith.constant 0 : index
    %9 = vector.load %arg6[%c0_12, %c0_13] : memref<4x1xf32, #tpu.memory_space<vmem>>, vector<4x1xf32>
    %10 = vector.broadcast %9 : vector<4x1xf32> to vector<4x256xf32>
    %11 = arith.addf %8, %10 : vector<4x256xf32>
    %c0_14 = arith.constant 0 : index
    %c0_15 = arith.constant 0 : index
    %c0_16 = arith.constant 0 : index
    %12 = vector.load %arg3[%c0_14, %c0_15, %c0_16] : memref<1x4x256xbf16, #tpu.memory_space<vmem>>, vector<1x4x256xbf16>
    %13 = vector.shape_cast %12 : vector<1x4x256xbf16> to vector<4x256xbf16>
    %14 = arith.extf %13 : vector<4x256xbf16> to vector<4x256xf32>
    %15 = arith.addf %11, %14 : vector<4x256xf32>
    %cst_17 = arith.constant 0.000000e+00 : f32
    %16 = vector.broadcast %cst_17 : f32 to vector<4x256xf32>
    %17 = arith.maximumf %15, %16 : vector<4x256xf32>
    %18 = arith.truncf %17 : vector<4x256xf32> to vector<4x256xbf16>
    %c0_18 = arith.constant 0 : index
    %c0_19 = arith.constant 0 : index
    %c0_20 = arith.constant 0 : index
    %19 = vector.load %arg7[%c0_18, %c0_19, %c0_20] : memref<1x4x256xbf16, #tpu.memory_space<vmem>>, vector<1x4x256xbf16>
    %20 = vector.shape_cast %19 : vector<1x4x256xbf16> to vector<4x256xbf16>
    %21 = vector.shape_cast %18 : vector<4x256xbf16> to vector<1x4x256xbf16>
    tpu.vector_store %arg7[%c0_18, %c0_19, %c0_20], %21 {strides = array<i32>} : memref<1x4x256xbf16, #tpu.memory_space<vmem>>, vector<1x4x256xbf16>,
    return
  }
  func.func @transform_0(%arg0: i32, %arg1: i32, %arg2: i32) -> (i32, i32, i32) {
    %c0_i32 = arith.constant 0 : i32
    %c0_i32_0 = arith.constant 0 : i32
    return %arg0, %c0_i32, %arg1 : i32, i32, i32
  }
  func.func @transform_1(%arg0: i32, %arg1: i32, %arg2: i32) -> (i32, i32, i32) {
    %c0_i32 = arith.constant 0 : i32
    %c0_i32_0 = arith.constant 0 : i32
    return %arg0, %c0_i32, %arg1 : i32, i32, i32
  }
  func.func @transform_2(%arg0: i32, %arg1: i32, %arg2: i32) -> (i32, i32) {
    %c0_i32 = arith.constant 0 : i32
    %c0_i32_0 = arith.constant 0 : i32
    return %arg2, %c0_i32 : i32, i32
  }
  func.func @transform_3(%arg0: i32, %arg1: i32, %arg2: i32) -> (i32, i32) {
    %c0_i32 = arith.constant 0 : i32
    %c0_i32_0 = arith.constant 0 : i32
    return %arg2, %c0_i32 : i32, i32
  }
  func.func @transform_4(%arg0: i32, %arg1: i32, %arg2: i32) -> (i32, i32, i32) {
    %c0_i32 = arith.constant 0 : i32
    return %arg0, %arg2, %arg1 : i32, i32, i32
  }
}

</mosaic_0001>

<llo_original>
// kernel: tpu_custom_call.1
$region0: #{tpu_custom_call.1}
  #allocation0 [shape = 'u32[]', space=smem, size = 0x4, offset = 0x4, fixed_abs, tag = 'smem constant byte address 0x4 - core index']
  #allocation1 [shape = 'u32[144,128]{1,0:T(1,128)}', space=vmem, size = 0x12000, scoped, tag = 'internal scratch']
  #allocation2 [shape = 'bf16[8,256]{1,0:T(8,128)(2,1)}', space=vmem, size = 0x1000, scoped, tag = 'scratch operand']
  %s0 = inlined_call_operand.hbm [shape: bf16[2,4,256], index: 0, kind: input, shape index: {}]
  %s1 = inlined_call_operand.vmem [shape: bf16[2,4,256], index: 1, kind: input, shape index: {}]
  %s2 = inlined_call_operand.vmem [shape: bf16[4,8], index: 2, kind: input, shape index: {}]
  %s3 = inlined_call_operand.vmem [shape: f32[4,1], index: 3, kind: input, shape index: {}]
  %s4 = inlined_call_operand.hbm [shape: bf16[2,4,256], index: 4, kind: output, shape index: {}]
  %s5 = sld [smem:[#allocation0]]
  $region53: #{tpu_custom_call.1} parent=0
    _
  %s7 = ssub.s32 1, %s5
  %s8 = scalar_select 0, %s7, %s5
  $region1: #{tpu_custom_call.1} parent=0
    #allocation3 [shape = 'u8[4096]{0}', space=vmem, size = 0x1000, scoped, tag = 'input window, operand 0']
    #allocation4 [shape = 's32[2]{0}', space=sflag, size = 0x8, scoped, tag = 'scoped memory for tpu_custom_call.1']
    #allocation5 [shape = 's32[2]{0}', space=sflag, size = 0x8, scoped, tag = 'scoped memory for tpu_custom_call.1']
    #allocation6 [shape = 'u8[4096]{0}', space=vmem, size = 0x1000, scoped, tag = 'output window, operand 0']
    %9 = vsyncpa [#allocation4], 0
    %s10 = scalar_lea.sflag [#allocation4], 1
    %11 = vsyncpa %s10, 0
    %12 = vsyncpa [#allocation5], 0
    %s13 = scalar_lea.sflag [#allocation5], 1
    %14 = vsyncpa %s13, 0
    loop: start=0, step=1, limit=4
    $region2: #{tpu_custom_call.1} parent=1 // loop_pre_header
      _
    $region3: #{tpu_custom_call.1} parent=1 // loop_header
      %s16 = sphi 0, %s20
      %p17 = scmp.ge.s32.totalorder %s16, 4
      %s23 = sphi 0, %s42
      %s24 = sphi 0, %s38
      %s25 = sphi 0, %s34
      %s26 = sphi 0, %s23
      %s27 = sphi 0, %s24
      %s28 = sphi 0, %s25
      %s29 = sphi 0, %s26
      %s30 = sphi 0, %s27
      %s31 = sphi 0, %s28
      %s47 = sphi 0, %s49
      %s50 = sphi 0, %s47
      %s51 = sphi 0, %s50
      %s67 = sphi 0, %s51
      %s75 = sphi 0, %s77
      %s78 = sphi 0, %s75
      %s79 = sphi 0, %s78
      %s95 = sphi 0, %s79
      %s101 = sphi 0, %s103
      %s104 = sphi 0, %s101
      %s105 = sphi 0, %s104
      %s121 = sphi 0, %s105
      %s127 = sphi 0, %s129
      %s130 = sphi 0, %s127
      %s131 = sphi 0, %s130
      %s147 = sphi 0, %s131
      %s157 = sphi 0, %s159
      %s160 = sphi 0, %s157
      %s161 = sphi 0, %s160
      %s177 = sphi 0, %s161
    $region4: #{tpu_custom_call.1} parent=1 // loop_header_branch
      %19 = sbr.rel (%p17) target = $region8
    $region5: #{tpu_custom_call.1} parent=1 // loop_body
      %s21 = ssub.s32 %s16, 1
      %s22 = ssub.s32 %s16, 2
      %s32 = sadd.s32 1, %s25
      %p33 = scmp.ge.s32.totalorder %s32, 1
      %s34 = scalar_select %p33, 0, %s32
      %s35 = sadd.s32 1, %s24
      %s36 = scalar_select %p33, %s35, %s24
      %p37 = scmp.ge.s32.totalorder %s36, 1
      %s38 = scalar_select %p37, 0, %s36
      %s39 = sadd.s32 1, %s23
      %s40 = scalar_select %p37, %s39, %s23
      %p41 = scmp.ge.s32.totalorder %s40, 2
      %s42 = scalar_select %p41, 0, %s40
      %s43 = ssub.s32 %s23, %s42
      %s44 = ssub.s32 %s24, %s38
      %s45 = sor.u32 %s43, %s44
      %p46 = scmp.eq.s32.totalorder %s45, 0
      %s48 = sadd.s32 %s47, 1
      %s49 = scalar_select %p46, %s47, %s48
      %p52 = pneg %p46
      %p53 = scmp.eq.s32.totalorder %s16, 1
      %p54 = por %p52, %p53
      %p55 = scmp.ne.s32.totalorder %s47, %s50
      %p56 = scmp.eq.s32.totalorder %s16, 0
      %p57 = por %p55, %p56
      %p58 = scmp.ne.s32.totalorder %s47, %s50
      %p59 = scmp.eq.s32.totalorder %s21, 1
      %p60 = por %p58, %p59
      %p61 = scmp.ne.s32.totalorder %s50, %s51
      %p62 = scmp.eq.s32.totalorder %s21, 0
      %p63 = por %p61, %p62
      %p64 = scmp.ne.s32.totalorder %s50, %s51
      %p65 = scmp.eq.s32.totalorder %s22, 1
      %p66 = por %p64, %p65
      %p68 = scmp.ne.s32.totalorder %s51, %s67
      %p69 = scmp.eq.s32.totalorder %s22, 0
      %p70 = por %p68, %p69
      %s71 = ssub.s32 %s23, %s42
      %s72 = ssub.s32 %s24, %s38
      %s73 = sor.u32 %s71, %s72
      %p74 = scmp.eq.s32.totalorder %s73, 0
      %s76 = sadd.s32 %s75, 1
      %s77 = scalar_select %p74, %s75, %s76
      %p80 = pneg %p74
      %p81 = scmp.eq.s32.totalorder %s16, 1
      %p82 = por %p80, %p81
      %p83 = scmp.ne.s32.totalorder %s75, %s78
      %p84 = scmp.eq.s32.totalorder %s16, 0
      %p85 = por %p83, %p84
      %p86 = scmp.ne.s32.totalorder %s75, %s78
      %p87 = scmp.eq.s32.totalorder %s21, 1
      %p88 = por %p86, %p87
      %p89 = scmp.ne.s32.totalorder %s78, %s79
      %p90 = scmp.eq.s32.totalorder %s21, 0
      %p91 = por %p89, %p90
      %p92 = scmp.ne.s32.totalorder %s78, %s79
      %p93 = scmp.eq.s32.totalorder %s22, 1
      %p94 = por %p92, %p93
      %p96 = scmp.ne.s32.totalorder %s79, %s95
      %p97 = scmp.eq.s32.totalorder %s22, 0
      %p98 = por %p96, %p97
      %s99 = ssub.s32 %s25, %s34
      %p100 = scmp.eq.s32.totalorder %s99, 0
      %s102 = sadd.s32 %s101, 1
      %s103 = scalar_select %p100, %s101, %s102
      %p106 = pneg %p100
      %p107 = scmp.eq.s32.totalorder %s16, 1
      %p108 = por %p106, %p107
      %p109 = scmp.ne.s32.totalorder %s101, %s104
      %p110 = scmp.eq.s32.totalorder %s16, 0
      %p111 = por %p109, %p110
      %p112 = scmp.ne.s32.totalorder %s101, %s104
      %p113 = scmp.eq.s32.totalorder %s21, 1
      %p114 = por %p112, %p113
      %p115 = scmp.ne.s32.totalorder %s104, %s105
      %p116 = scmp.eq.s32.totalorder %s21, 0
      %p117 = por %p115, %p116
      %p118 = scmp.ne.s32.totalorder %s104, %s105
      %p119 = scmp.eq.s32.totalorder %s22, 1
      %p120 = por %p118, %p119
      %p122 = scmp.ne.s32.totalorder %s105, %s121
      %p123 = scmp.eq.s32.totalorder %s22, 0
      %p124 = por %p122, %p123
      %s125 = ssub.s32 %s25, %s34
      %p126 = scmp.eq.s32.totalorder %s125, 0
      %s128 = sadd.s32 %s127, 1
      %s129 = scalar_select %p126, %s127, %s128
      %p132 = pneg %p126
      %p133 = scmp.eq.s32.totalorder %s16, 1
      %p134 = por %p132, %p133
      %p135 = scmp.ne.s32.totalorder %s127, %s130
      %p136 = scmp.eq.s32.totalorder %s16, 0
      %p137 = por %p135, %p136
      %p138 = scmp.ne.s32.totalorder %s127, %s130
      %p139 = scmp.eq.s32.totalorder %s21, 1
      %p140 = por %p138, %p139
      %p141 = scmp.ne.s32.totalorder %s130, %s131
      %p142 = scmp.eq.s32.totalorder %s21, 0
      %p143 = por %p141, %p142
      %p144 = scmp.ne.s32.totalorder %s130, %s131
      %p145 = scmp.eq.s32.totalorder %s22, 1
      %p146 = por %p144, %p145
      %p148 = scmp.ne.s32.totalorder %s131, %s147
      %p149 = scmp.eq.s32.totalorder %s22, 0
      %p150 = por %p148, %p149
      %s151 = ssub.s32 %s23, %s42
      %s152 = ssub.s32 %s25, %s34
      %s153 = sor.u32 %s151, %s152
      %s154 = ssub.s32 %s24, %s38
      %s155 = sor.u32 %s153, %s154
      %p156 = scmp.eq.s32.totalorder %s155, 0
      %s158 = sadd.s32 %s157, 1
      %s159 = scalar_select %p156, %s157, %s158
      %p162 = pneg %p156
      %p163 = scmp.eq.s32.totalorder %s16, 1
      %p164 = por %p162, %p163
      %p165 = scmp.ne.s32.totalorder %s157, %s160
      %p166 = scmp.eq.s32.totalorder %s16, 0
      %p167 = por %p165, %p166
      %p168 = scmp.ne.s32.totalorder %s157, %s160
      %p169 = scmp.eq.s32.totalorder %s21, 1
      %p170 = por %p168, %p169
      %p171 = scmp.ne.s32.totalorder %s160, %s161
      %p172 = scmp.eq.s32.totalorder %s21, 0
      %p173 = por %p171, %p172
      %p174 = scmp.ne.s32.totalorder %s160, %s161
      %p175 = scmp.eq.s32.totalorder %s22, 1
      %p176 = por %p174, %p175
      %p178 = scmp.ne.s32.totalorder %s161, %s177
      %p179 = scmp.eq.s32.totalorder %s22, 0
      %p180 = por %p178, %p179
      %p181 = scmp.le.s32.totalorder 1, %s16
      %p182 = scmp.lt.s32.totalorder %s16, 3
      %p183 = pnand %p181, %p182
      %p184 = pneg %p183
      // Predicated region
      $region9: #{tpu_custom_call.1} parent=5 // pred_check
        _
      $region10: #{tpu_custom_call.1} parent=5 // pred_check_branch
        %186 = sbr.rel (%p183) target = $region12
      $region11: #{tpu_custom_call.1} parent=5 // pred_region
        %s187 = ssub.s32 %s16, 1
        // Predicated region
        $region13: #{tpu_custom_call.1} parent=11 // pred_check
          %p188 = pneg %p117
        $region14: #{tpu_custom_call.1} parent=11 // pred_check_branch
          %190 = sbr.rel (%p188) target = $region16
        $region15: #{tpu_custom_call.1} parent=11 // pred_region
          %p191 = scmp.lt.s32.totalorder %s28, 0
          %s192 = scalar_select %p191, %s28, 0
          %s193 = smul.addr %s192, 2
          %s194 = scalar_lea.vmem %s2, %s193
        $region16: #{tpu_custom_call.1} parent=11 // pred_fallthru
          _
        // Predicated region
        $region17: #{tpu_custom_call.1} parent=11 // pred_check
          %p195 = pneg %p143
        $region18: #{tpu_custom_call.1} parent=11 // pred_check_branch
          %197 = sbr.rel (%p195) target = $region20
        $region19: #{tpu_custom_call.1} parent=11 // pred_region
          %p198 = scmp.lt.s32.totalorder %s28, 0
          %s199 = scalar_select %p198, %s28, 0
          %s200 = smul.addr %s199, 4
          %s201 = scalar_lea.vmem %s3, %s200
        $region20: #{tpu_custom_call.1} parent=11 // pred_fallthru
          _
      $region12: #{tpu_custom_call.1} parent=5 // pred_fallthru
        _
      %p202 = scmp.lt.s32.totalorder %s16, 2
      // Predicated region
      $region21: #{tpu_custom_call.1} parent=5 // pred_check
        %p203 = pneg %p202
      $region22: #{tpu_custom_call.1} parent=5 // pred_check_branch
        %205 = sbr.rel (%p203) target = $region24
      $region23: #{tpu_custom_call.1} parent=5 // pred_region
        // Predicated region
        $region25: #{tpu_custom_call.1} parent=23 // pred_check
          %p206 = pneg %p57
        $region26: #{tpu_custom_call.1} parent=23 // pred_check_branch
          %208 = sbr.rel (%p206) target = $region28
        $region27: #{tpu_custom_call.1} parent=23 // pred_region
          %s209 = sand.u32 %s47, 1
          %s210 = scalar_lea.sflag [#allocation4], %s209
          %s211 = sand.u32 %s47, 1
          %s212 = smul.addr %s211, 4
          %s213 = scalar_lea.vmem [#allocation3], %s212
          %s214 = smul.u32 2, %s24
          %s216 = ssub.s32 64, 64
          %217 = vsyncadd %s210, %s216
          %s218 = smul.addr %s23, 2
          %s219 = sadd.s32 %s214, %s218
          %s220 = smul.addr %s219, 32
          %s221 = scalar_lea.hbm %s0, %s220
          %s223 = sshll.u32 %s213, 4
          %s224 = int_to_ptr.vmem [resolvable:$true] %s223
          %226 = dma.hbm_to_vmem [thread:$0]  %s221, 64, %s224, %s210
        $region28: #{tpu_custom_call.1} parent=23 // pred_fallthru
          _
        // Predicated region
        $region29: #{tpu_custom_call.1} parent=23 // pred_check
          %p227 = pneg %p85
        $region30: #{tpu_custom_call.1} parent=23 // pred_check_branch
          %229 = sbr.rel (%p227) target = $region32
        $region31: #{tpu_custom_call.1} parent=23 // pred_region
          %s230 = smul.u32 2, %s24
          %p231 = scmp.lt.s32.totalorder %s23, 1
          %s232 = scalar_select %p231, %s23, 1
          %p233 = scmp.lt.s32.totalorder %s230, 1
          %s234 = scalar_select %p233, %s230, 1
          %s235 = smul.addr %s232, 2
          %s236 = sadd.s32 %s234, %s235
          %s237 = smul.addr %s236, 2
          %s238 = scalar_lea.vmem %s1, %s237
          %s239 = smul.u32 2, %s24
        $region32: #{tpu_custom_call.1} parent=23 // pred_fallthru
          _
      $region24: #{tpu_custom_call.1} parent=5 // pred_fallthru
        _
      %p240 = scmp.le.s32.totalorder 1, %s16
      %p241 = scmp.lt.s32.totalorder %s16, 3
      %p242 = pnand %p240, %p241
      %p243 = pneg %p242
      // Predicated region
      $region33: #{tpu_custom_call.1} parent=5 // pred_check
        _
      $region34: #{tpu_custom_call.1} parent=5 // pred_check_branch
        %245 = sbr.rel (%p242) target = $region36
      $region35: #{tpu_custom_call.1} parent=5 // pred_region
        %s246 = ssub.s32 %s16, 1
        %s247 = sand.u32 %s50, 1
        %s248 = scalar_lea.sflag [#allocation4], %s247
        %s249 = sand.u32 %s50, 1
        %s250 = smul.addr %s249, 4
        %s251 = scalar_lea.vmem [#allocation3], %s250
        // Predicated region
        $region37: #{tpu_custom_call.1} parent=35 // pred_check
          %p252 = pneg %p63
        $region38: #{tpu_custom_call.1} parent=35 // pred_check_branch
          %254 = sbr.rel (%p252) target = $region40
        $region39: #{tpu_custom_call.1} parent=35 // pred_region
          %255 = dma.done %s248, 64
        $region40: #{tpu_custom_call.1} parent=35 // pred_fallthru
          _
        %s256 = sand.u32 %s50, 1
        %s257 = scalar_lea.sflag [#allocation4], %s256
        %s258 = sand.u32 %s50, 1
        %s259 = smul.addr %s258, 4
        %s260 = scalar_lea.vmem [#allocation3], %s259
        %p261 = pneg %p63
        %p262 = pneg %p60
        %s263 = smul.u32 2, %s27
        %p264 = scmp.lt.s32.totalorder %s26, 1
        %s265 = scalar_select %p264, %s26, 1
        %p266 = scmp.lt.s32.totalorder %s263, 1
        %s267 = scalar_select %p266, %s263, 1
        %s268 = smul.addr %s265, 2
        %s269 = sadd.s32 %s267, %s268
        %s270 = smul.addr %s269, 2
        %s271 = scalar_lea.vmem %s1, %s270
        %p272 = pneg %p91
        %p273 = pneg %p88
        %p274 = scmp.lt.s32.totalorder %s28, 0
        %s275 = scalar_select %p274, %s28, 0
        %s276 = smul.addr %s275, 2
        %s277 = scalar_lea.vmem %s2, %s276
        %p278 = pneg %p117
        %p279 = pneg %p114
        %p280 = scmp.lt.s32.totalorder %s28, 0
        %s281 = scalar_select %p280, %s28, 0
        %s282 = smul.addr %s281, 4
        %s283 = scalar_lea.vmem %s3, %s282
        %p284 = pneg %p143
        %p285 = pneg %p140
        %p286 = pneg %p173
        %p287 = pneg %p170
        %s288 = sand.u32 %s160, 1
        %s289 = scalar_lea.sflag [#allocation5], %s288
        %s290 = sand.u32 %s160, 1
        %s291 = smul.addr %s290, 4
        %s292 = scalar_lea.vmem [#allocation6], %s291
        %s293 = smul.u32 2, %s27
        %s294 = smul.u32 2, %s27
        %p295 = scmp.lt.s32.totalorder %s26, 1
        %s296 = scalar_select %p295, %s26, 1
        %p297 = scmp.lt.s32.totalorder %s294, 1
        %s298 = scalar_select %p297, %s294, 1
        %s299 = smul.addr %s296, 2
        %s300 = sadd.s32 %s298, %s299
        %s301 = smul.addr %s300, 2
        %s302 = scalar_lea.vmem %s1, %s301
        %s303 = smul.u32 2, %s27
        %p304 = scmp.lt.s32.totalorder %s28, 0
        %s305 = scalar_select %p304, %s28, 0
        %s306 = smul.addr %s305, 2
        %s307 = scalar_lea.vmem %s2, %s306
        %p308 = scmp.lt.s32.totalorder %s28, 0
        %s309 = scalar_select %p308, %s28, 0
        %s310 = smul.addr %s309, 4
        %s311 = scalar_lea.vmem %s3, %s310
        %s312 = smul.u32 2, %s27
        %v314 = vld [vmem:[%s251] sm:$0xf]
        %v317 = vunpack.c.l.s4 1983009808
        %v318 = vunpack.c.0.s8 %v317
        %v319 = vlaneseq
        %v320 = vshrl.u32 %v319, 7
        %v321 = vsub.s32 %v318, %v320
        %v322 = vrot.slane %v314, %v321
        %324 = vst [vmem:[#allocation2] sm:$0x33] %v322
        %v325 = vld [vmem:[%s302] sm:$0xf]
        %v327 = vcombine.low %v325, %v325
        %v329 = vunpack.c.l.s4 1983009808
        %v330 = vunpack.c.0.s8 %v329
        %v331 = vlaneseq
        %v332 = vshrl.u32 %v331, 7
        %v333 = vsub.s32 %v330, %v332
        %v334 = vrot.slane %v327, %v333
        %336 = vst [vmem:[#allocation2] sm:$0xcc] %v334
        %v337 = vld [vmem:[%s307] sm:$0x3]
        %v338 = vld [vmem:[#allocation2] sm:$0xff]
        %v339 = vld [vmem:[%s311] sm:$0xf]
        %341 = vset.pattern.permute.xlu0 0
        %342 = vperm.xlu0 %341, %v339
        %v343 = vpop.permute.xlu0 %342
        %v346 = vunpack.c.l.b16 %v338
        %v347 = vunpack.c.h.b16 %v338
        %v348 = vpack.c.b16 %v346, %v346
        %v349 = vpack.c.b16 %v347, %v347
        %vm350 = vcmask 64512
        %v352 = vsel %vm350, %v337, 0
        %vm354 = vcmask 1043456
        %v356 = vsel %vm354, %v348, 0
        %v359 = vsel %vm354, %v349, 0
        %361 = vmatprep.subr.bf16.mxu0 %v359
        %362 = vmatpush1.bf16.msra.mxu0 %v356
        %363 = vmatprep.subr.bf16.mxu0 0
        %364 = vmatpush1.bf16.msra.mxu0 0
        %365 = vmatprep.subr.bf16.mxu0 0
        %366 = vmatpush1.bf16.msra.mxu0 0
        %367 = vmatprep.subr.bf16.mxu0 0
        %368 = vmatpush1.bf16.msra.mxu0 0
        %369 = vmatprep.subr.bf16.mxu0 0
        %370 = vmatpush1.bf16.msra.mxu0 0
        %371 = vmatprep.subr.bf16.mxu0 0
        %372 = vmatpush1.bf16.msra.mxu0 0
        %373 = vmatprep.subr.bf16.mxu0 0
        %374 = vmatpush1.bf16.msra.mxu0 0
        %375 = vmatprep.subr.bf16.mxu0 0
        %376 = vmatpush1.bf16.msra.mxu0 0
        %377 = vmatprep.subr.bf16.mxu0 0
        %378 = vmatpush1.bf16.msra.mxu0 0
        %379 = vmatprep.subr.bf16.mxu0 0
        %380 = vmatpush1.bf16.msra.mxu0 0
        %381 = vmatprep.subr.bf16.mxu0 0
        %382 = vmatpush1.bf16.msra.mxu0 0
        %383 = vmatprep.subr.bf16.mxu0 0
        %384 = vmatpush1.bf16.msra.mxu0 0
        %385 = vmatprep.subr.bf16.mxu0 0
        %386 = vmatpush1.bf16.msra.mxu0 0
        %387 = vmatprep.subr.bf16.mxu0 0
        %388 = vmatpush1.bf16.msra.mxu0 0
        %389 = vmatprep.subr.bf16.mxu0 0
        %390 = vmatpush1.bf16.msra.mxu0 0
        %391 = vmatprep.subr.bf16.mxu0 0
        %392 = vmatpush1.bf16.msra.mxu0 0
        %393 = vmatprep.mubr.bf16.mxu0 0
        %394 = vmatmul.mubr.bf16.gmra.mrb[0].mxu0 %v352
        %v395 = vpop.f32.mrb[0].mxu0
        %v396 = vadd.f32 %v343, %v395
        %v397 = vpop.f32.mrb[0].mxu0
        %v398 = vadd.f32 %v343, %v397
        %v399 = vpop.f32.mrb[0].mxu0
        %v400 = vpop.f32.mrb[0].mxu0
        %401 = vdwg.mxu0
        %v402 = vld [vmem:[%s251] sm:$0xf]
        %v403 = vunpack.c.l.bf16 %v402
        %v405 = vcombine.high %v403, %v403
        %v407 = vadd.f32 %v396, %v403
        %v408 = vadd.f32 %v398, %v405
        %v409 = vmax.f32 %v407, 0.0
        %v410 = vmax.f32 %v408, 0.0
        %v411 = vpack.c.bf16 %v409, %v409
        %v412 = vpack.c.bf16 %v410, %v410
        %v415 = vcombine.low %v411, %v412
        %v417 = vunpack.c.l.s4 1983009808
        %v418 = vunpack.c.0.s8 %v417
        %v419 = vlaneseq
        %v420 = vshrl.u32 %v419, 7
        %v421 = vsub.s32 %v418, %v420
        %v422 = vrot.slane %v415, %v421
        %424 = vst [vmem:[%s292] sm:$0xf] %v422
        %s425 = sand.u32 %s160, 1
        %s426 = scalar_lea.sflag [#allocation5], %s425
        %s427 = sand.u32 %s160, 1
        %s428 = smul.addr %s427, 4
        %s429 = scalar_lea.vmem [#allocation6], %s428
        // Predicated region
        $region41: #{tpu_custom_call.1} parent=35 // pred_check
          %p430 = pneg %p170
        $region42: #{tpu_custom_call.1} parent=35 // pred_check_branch
          %432 = sbr.rel (%p430) target = $region44
        $region43: #{tpu_custom_call.1} parent=35 // pred_region
          %s433 = smul.u32 2, %s27
          %s435 = ssub.s32 64, 64
          %436 = vsyncadd %s426, %s435
          %s437 = smul.addr %s28, 2
          %s438 = sadd.s32 %s433, %s437
          %s439 = smul.addr %s26, 2
          %s440 = sadd.s32 %s438, %s439
          %s441 = smul.addr %s440, 32
          %s442 = scalar_lea.hbm %s4, %s441
          %s444 = sshll.u32 %s429, 4
          %s445 = int_to_ptr.vmem [resolvable:$true] %s444
          %447 = dma.vmem_to_hbm [thread:$0]  %s445, 64, %s442, %s426
        $region44: #{tpu_custom_call.1} parent=35 // pred_fallthru
          _
      $region36: #{tpu_custom_call.1} parent=5 // pred_fallthru
        _
      %p448 = scmp.le.s32.totalorder 2, %s16
      // Predicated region
      $region45: #{tpu_custom_call.1} parent=5 // pred_check
        %p449 = pneg %p448
      $region46: #{tpu_custom_call.1} parent=5 // pred_check_branch
        %451 = sbr.rel (%p449) target = $region48
      $region47: #{tpu_custom_call.1} parent=5 // pred_region
        %s452 = ssub.s32 %s16, 2
        // Predicated region
        $region49: #{tpu_custom_call.1} parent=47 // pred_check
          %p453 = pneg %p176
        $region50: #{tpu_custom_call.1} parent=47 // pred_check_branch
          %455 = sbr.rel (%p453) target = $region52
        $region51: #{tpu_custom_call.1} parent=47 // pred_region
          %s456 = sand.u32 %s161, 1
          %s457 = scalar_lea.sflag [#allocation5], %s456
          %s458 = sand.u32 %s161, 1
          %s459 = smul.addr %s458, 4
          %s460 = scalar_lea.vmem [#allocation6], %s459
          %461 = dma.done %s457, 64
        $region52: #{tpu_custom_call.1} parent=47 // pred_fallthru
          _
      $region48: #{tpu_custom_call.1} parent=5 // pred_fallthru
        _
    $region6: #{tpu_custom_call.1} parent=1 // loop_footer
      %s20 = sadd.s32 1, %s16
    $region7: #{tpu_custom_call.1} parent=1 // loop_footer_branch
      %15 = sbr.rel target = $region3
    $region8: #{tpu_custom_call.1} parent=1 // loop_exit
      _
    %462 = vsyncpa [#allocation4], 1
    %s463 = scalar_lea.sflag [#allocation4], 1
    %464 = vsyncpa %s463, 1
    %465 = vsyncpa [#allocation5], 1
    %s466 = scalar_lea.sflag [#allocation5], 1
    %467 = vsyncpa %s466, 1

</llo_original>
